<compile_context>
chip_gen: v7x
topology: tpu7x:2x2x1
jax: 0.10.0
libtpu: 0.0.40
codegen_flags: <defaults>
</compile_context>

<pallas_src>
import functools

import jax
import jax.numpy as jnp
from jax.experimental import pallas as pl
from jax.experimental.pallas import tpu as pltpu


LANE = 128
SUBLANE = 8
ACC_ROWS = 8  # accumulator height: one f32 vreg


def _round_up(x, m):
    return ((x + m - 1) // m) * m


def _num_tensorcores():
    """Best-effort TensorCore count query; falls back to 1 (always correct)."""
    try:
        dev = jax.devices()[0]
        for attr in ("num_cores", "core_count"):
            v = getattr(dev, attr, None)
            if isinstance(v, int) and v > 0:
                return max(1, min(2, v))
    except Exception:
        pass
    return 1


def _masked_sq_sum_kernel(
    prob_ref, sum_out_ref, cnt_out_ref, sum_acc, cnt_acc,
    *, ignore_index, rows_valid, block_rows, blocks_per_split,
):
    """Accumulate per-lane partial sums of prob^2 * mask and mask."""
    c = pl.program_id(0)      # split axis ("parallel"; >1 only on multi-TC chips)
    i = pl.program_id(1)      # row-block axis ("arbitrary" reduction)

    @pl.when(i == 0)
    def _():
        sum_acc[...] = jnp.zeros(sum_acc.shape, jnp.float32)
        cnt_acc[...] = jnp.zeros(cnt_acc.shape, jnp.float32)

    blk = c * blocks_per_split + i               # intended (unclamped) block id
    row_start = blk * block_rows                 # intended global row offset
    # Scalar predicate (essentially free): true only for the partial last
    # block and for clamped (over-assigned) grid cells.
    needs_row_mask = row_start + block_rows > rows_valid

    p = prob_ref[...].astype(jnp.float32)        # (block_rows, 128)
    ign = jnp.float32(ignore_index)
    n_sub = block_rows // ACC_ROWS

    def accumulate(mask):
        sq = jnp.where(mask, p * p, jnp.float32(0.0))
        # Pure-VALU add-tree into one-vreg accumulators (no acc ld/st per vreg
        # beyond the final (8,128) read-modify-write).
        sum_acc[...] += jnp.sum(sq.reshape(n_sub, ACC_ROWS, LANE), axis=0)
        cnt_acc[...] += jnp.sum(
            mask.astype(jnp.float32).reshape(n_sub, ACC_ROWS, LANE), axis=0)

    @pl.when(jnp.logical_not(needs_row_mask))
    def _():
        # Fast path: every row of this tile is valid data.
        accumulate(p != ign)

    @pl.when(needs_row_mask)
    def _():
        # Tail / clamped path: mask rows beyond the valid row range.  For a
        # clamped block row_start >= rows_valid, so everything masks to zero.
        rows_iota = jax.lax.broadcasted_iota(jnp.int32, p.shape, 0)
        valid = (row_start + rows_iota) < rows_valid
        accumulate(valid & (p != ign))

    # Lane-dense (1, 8, 128) writeback, once per split; cross-lane reduction
    # of these tiny partials happens in the wrapper.
    @pl.when(i == pl.num_programs(1) - 1)
    def _():
        sum_out_ref[...] = sum_acc[...].reshape(sum_out_ref.shape)
        cnt_out_ref[...] = cnt_acc[...].reshape(cnt_out_ref.shape)


def max_square_loss(pred, prob, ignore_index=-1, num_class=19,
                    block_rows=2048, num_splits=None):
    """Pallas implementation of MaxSquareloss.forward.

    pred : (N, C, H, W)  -- unused (kept for API parity with the nn.Module)
    prob : (N, C, H, W)
    returns: scalar f32 loss
    """
    del pred, num_class  # pred is unused in the reference forward pass

    if num_splits is None:
        num_splits = _num_tensorcores()     # 2 on v7x, 1 on v5e/v6e
    num_splits = max(1, int(num_splits))

    flat = prob.reshape(-1)                 # contiguous reshape: no copy
    n = flat.shape[0]
    rem = n % LANE
    n_main = n - rem

    # Misaligned tail (< 128 elems) reduced in plain JAX -- no full-tensor pad.
    tail_sum = jnp.float32(0.0)
    tail_cnt = jnp.float32(0.0)
    if rem:
        tail = flat[n_main:].astype(jnp.float32)
        tmask = tail != jnp.float32(ignore_index)
        tail_sum = jnp.sum(jnp.where(tmask, tail * tail, jnp.float32(0.0)))
        tail_cnt = jnp.sum(tmask.astype(jnp.float32))

    if n_main == 0:
        # NOTE: empty / all-tail input; cnt == 0 -> NaN, matching torch.mean([]).
        return -(tail_sum / tail_cnt) * jnp.float32(0.5)

    main = flat[:n_main] if rem else flat   # common case: no slice, no copy
    rows = n_main // LANE
    slab = main.reshape(rows, LANE)         # lane-dense view

    # Row tiling: large tiles (HBM streaming); respect sublane packing for the
    # input dtype (8 rows f32 / 16 rows bf16 / 32 rows int8) and ACC_ROWS.
    itemsize = int(jnp.dtype(slab.dtype).itemsize)
    sub = max(ACC_ROWS, SUBLANE * max(1, 4 // itemsize))
    block_rows_eff = min(max(block_rows, sub), _round_up(rows, sub))
    block_rows_eff = _round_up(block_rows_eff, sub)

    total_blocks = pl.cdiv(rows, block_rows_eff)
    blocks_per_split = pl.cdiv(total_blocks, num_splits)
    grid = (num_splits, blocks_per_split)

    def in_index_map(c, i):
        # Clamp so over-assigned grid cells re-read the last block; their
        # contribution is zeroed by the kernel's row-validity mask.
        return (jnp.minimum(c * blocks_per_split + i, total_blocks - 1), 0)

    kernel = functools.partial(
        _masked_sq_sum_kernel,
        ignore_index=ignore_index,
        rows_valid=rows,
        block_rows=block_rows_eff,
        blocks_per_split=blocks_per_split,
    )

    sum_out, cnt_out = pl.pallas_call(
        kernel,
        out_shape=(
            jax.ShapeDtypeStruct((num_splits, ACC_ROWS, LANE), jnp.float32),
            jax.ShapeDtypeStruct((num_splits, ACC_ROWS, LANE), jnp.float32),
        ),
        grid_spec=pltpu.PrefetchScalarGridSpec(
            num_scalar_prefetch=0,
            grid=grid,
            in_specs=[pl.BlockSpec((block_rows_eff, LANE), in_index_map)],
            out_specs=(
                pl.BlockSpec((1, ACC_ROWS, LANE), lambda c, i: (c, 0, 0)),
                pl.BlockSpec((1, ACC_ROWS, LANE), lambda c, i: (c, 0, 0)),
            ),
            scratch_shapes=[
                pltpu.VMEM((ACC_ROWS, LANE), jnp.float32),
                pltpu.VMEM((ACC_ROWS, LANE), jnp.float32),
            ],
        ),
        compiler_params=pltpu.CompilerParams(
            # TODO(synk): verify on v7x xprof that the split axis shards across
            # both TensorCores; if not, switch to pltpu.CORE_PARALLEL.
            dimension_semantics=("parallel", "arbitrary"),
            vmem_limit_bytes=32 * 1024 * 1024,
        ),
    )(slab)

    sum_sq = jnp.sum(sum_out) + tail_sum
    cnt = jnp.sum(cnt_out) + tail_cnt
    # NOTE: cnt == 0 (everything ignored) yields NaN, matching torch.mean([]).
    return -(sum_sq / cnt) * jnp.float32(0.5)


def _reference(prob, ignore_index=-1):
    p = prob.astype(jnp.float32)
    mask = p != ignore_index
    s = jnp.sum(jnp.where(mask, p * p, 0.0))
    c = jnp.sum(mask.astype(jnp.float32))
    return -(s / c) / 2.0


if __name__ == "__main__":
    key = jax.random.PRNGKey(0)
    k1, k2 = jax.random.split(key)

    N, C, H, W = 2, 4, 16, 16  # small NCHW shapes consistent with the module
    pred = jax.random.normal(k1, (N, C, H, W), dtype=jnp.float32)
    prob = jax.nn.softmax(
        jax.random.normal(k2, (N, C, H, W), dtype=jnp.float32), axis=1)
    # Inject a few "ignored" entries equal to ignore_index to exercise the mask.
    prob = prob.at[0, 0, 0, :4].set(-1.0)

    out = jax.block_until_ready(max_square_loss(pred, prob, ignore_index=-1))
    ref = jax.block_until_ready(_reference(prob, ignore_index=-1))
    assert jnp.allclose(out, ref, rtol=1e-5, atol=1e-6), (out, ref)

    # Also exercise a lane-misaligned size (tail path) and a multi-block size.
    prob2 = jax.nn.softmax(
        jax.random.normal(k2, (3, 5, 7, 11), dtype=jnp.float32), axis=1)
    out2 = jax.block_until_ready(max_square_loss(None, prob2, ignore_index=-1))
    ref2 = jax.block_until_ready(_reference(prob2, ignore_index=-1))
    assert jnp.allclose(out2, ref2, rtol=1e-5, atol=1e-6), (out2, ref2)

    print("KERNEL_OK")
</pallas_src>

<mosaic_0001>
module attributes {stable_mosaic.version = 11 : i64} {
  func.func @_masked_sq_sum_kernel(%arg0: i32, %arg1: i32, %arg2: memref<16x128xf32, #tpu.memory_space<vmem>>, %arg3: memref<1x8x128xf32, #tpu.memory_space<vmem>>, %arg4: memref<1x8x128xf32, #tpu.memory_space<vmem>>, %arg5: memref<8x128xf32, #tpu.memory_space<vmem>>, %arg6: memref<8x128xf32, #tpu.memory_space<vmem>>) attributes {dimension_semantics = [#tpu.dimension_semantics<parallel>, #tpu.dimension_semantics<arbitrary>], iteration_bounds = array<i64: 1, 1>, scalar_prefetch = 0 : i64, scratch_operands = 2 : i64, tpu.core_type = #tpu.core_type<tc>, window_params = [{transform_indices = @transform_0, window_bounds = array<i64: 16, 128>}, {transform_indices = @transform_1, window_bounds = array<i64: 1, 8, 128>}, {transform_indices = @transform_2, window_bounds = array<i64: 1, 8, 128>}]} {
    %c0_i32 = arith.constant 0 : i32
    %0 = arith.cmpi eq, %arg1, %c0_i32 : i32
    %1 = arith.extui %0 : i1 to i32
    %c0_i32_0 = arith.constant 0 : i32
    %2 = arith.cmpi ne, %1, %c0_i32_0 : i32
    scf.if %2 {
      %cst_9 = arith.constant 0.000000e+00 : f32
      %17 = vector.broadcast %cst_9 : f32 to vector<8x128xf32>
      %c0_10 = arith.constant 0 : index
      %c0_11 = arith.constant 0 : index
      %18 = vector.load %arg5[%c0_10, %c0_11] : memref<8x128xf32, #tpu.memory_space<vmem>>, vector<8x128xf32>
      tpu.vector_store %arg5[%c0_10, %c0_11], %17 {strides = array<i32>} : memref<8x128xf32, #tpu.memory_space<vmem>>, vector<8x128xf32>,
      %cst_12 = arith.constant 0.000000e+00 : f32
      %19 = vector.broadcast %cst_12 : f32 to vector<8x128xf32>
      %c0_13 = arith.constant 0 : index
      %c0_14 = arith.constant 0 : index
      %20 = vector.load %arg6[%c0_13, %c0_14] : memref<8x128xf32, #tpu.memory_space<vmem>>, vector<8x128xf32>
      tpu.vector_store %arg6[%c0_13, %c0_14], %19 {strides = array<i32>} : memref<8x128xf32, #tpu.memory_space<vmem>>, vector<8x128xf32>,
    } else {
    }
    %c1_i32 = arith.constant 1 : i32
    %3 = arith.muli %arg0, %c1_i32 : i32
    %4 = arith.addi %3, %arg1 : i32
    %c16_i32 = arith.constant 16 : i32
    %5 = arith.muli %4, %c16_i32 : i32
    %c16_i32_1 = arith.constant 16 : i32
    %6 = arith.addi %5, %c16_i32_1 : i32
    %c16_i32_2 = arith.constant 16 : i32
    %7 = arith.cmpi sgt, %6, %c16_i32_2 : i32
    %c0 = arith.constant 0 : index
    %c0_3 = arith.constant 0 : index
    %8 = vector.load %arg2[%c0, %c0_3] : memref<16x128xf32, #tpu.memory_space<vmem>>, vector<16x128xf32>
    %true = arith.constant true
    %9 = arith.xori %7, %true : i1
    %10 = arith.extui %9 : i1 to i32
    %cst = arith.constant -1.000000e+00 : f32
    %c0_i32_4 = arith.constant 0 : i32
    %11 = arith.cmpi ne, %10, %c0_i32_4 : i32
    scf.if %11 {
      %17 = vector.broadcast %cst : f32 to vector<16x128xf32>
      %18 = arith.cmpf one, %8, %17 : vector<16x128xf32>
      %19 = arith.mulf %8, %8 : vector<16x128xf32>
      %cst_9 = arith.constant 0.000000e+00 : f32
      %20 = vector.broadcast %cst_9 : f32 to vector<16x128xf32>
      %21 = arith.select %18, %19, %20 : vector<16x128xi1>, vector<16x128xf32>
      %c0_10 = arith.constant 0 : index
      %c0_11 = arith.constant 0 : index
      %22 = vector.load %arg5[%c0_10, %c0_11] : memref<8x128xf32, #tpu.memory_space<vmem>>, vector<8x128xf32>
      %23 = vector.shape_cast %21 : vector<16x128xf32> to vector<2x8x128xf32>
      %cst_12 = arith.constant dense<0.000000e+00> : vector<8x128xf32>
      %24 = vector.multi_reduction <add>, %23, %cst_12 [0] : vector<2x8x128xf32> to vector<8x128xf32>
      %25 = arith.addf %22, %24 : vector<8x128xf32>
      %c0_13 = arith.constant 0 : index
      %c0_14 = arith.constant 0 : index
      %26 = vector.load %arg5[%c0_13, %c0_14] : memref<8x128xf32, #tpu.memory_space<vmem>>, vector<8x128xf32>
      tpu.vector_store %arg5[%c0_13, %c0_14], %25 {strides = array<i32>} : memref<8x128xf32, #tpu.memory_space<vmem>>, vector<8x128xf32>,
      %c0_15 = arith.constant 0 : index
      %c0_16 = arith.constant 0 : index
      %27 = vector.load %arg6[%c0_15, %c0_16] : memref<8x128xf32, #tpu.memory_space<vmem>>, vector<8x128xf32>
      %28 = arith.extui %18 : vector<16x128xi1> to vector<16x128xi32>
      %29 = arith.sitofp %28 : vector<16x128xi32> to vector<16x128xf32>
      %30 = vector.shape_cast %29 : vector<16x128xf32> to vector<2x8x128xf32>
      %cst_17 = arith.constant dense<0.000000e+00> : vector<8x128xf32>
      %31 = vector.multi_reduction <add>, %30, %cst_17 [0] : vector<2x8x128xf32> to vector<8x128xf32>
      %32 = arith.addf %27, %31 : vector<8x128xf32>
      %c0_18 = arith.constant 0 : index
      %c0_19 = arith.constant 0 : index
      %33 = vector.load %arg6[%c0_18, %c0_19] : memref<8x128xf32, #tpu.memory_space<vmem>>, vector<8x128xf32>
      tpu.vector_store %arg6[%c0_18, %c0_19], %32 {strides = array<i32>} : memref<8x128xf32, #tpu.memory_space<vmem>>, vector<8x128xf32>,
    } else {
    }
    %12 = arith.extui %7 : i1 to i32
    %cst_5 = arith.constant -1.000000e+00 : f32
    %c0_i32_6 = arith.constant 0 : i32
    %13 = arith.cmpi ne, %12, %c0_i32_6 : i32
    scf.if %13 {
      %17 = tpu.iota {dimensions = array<i32: 0>} : vector<16x128xi32>
      %18 = vector.broadcast %5 : i32 to vector<16x128xi32>
      %19 = arith.addi %18, %17 : vector<16x128xi32>
      %c16_i32_9 = arith.constant 16 : i32
      %20 = vector.broadcast %c16_i32_9 : i32 to vector<16x128xi32>
      %21 = arith.cmpi slt, %19, %20 : vector<16x128xi32>
      %22 = vector.broadcast %cst_5 : f32 to vector<16x128xf32>
      %23 = arith.cmpf one, %8, %22 : vector<16x128xf32>
      %24 = arith.andi %21, %23 : vector<16x128xi1>
      %25 = arith.mulf %8, %8 : vector<16x128xf32>
      %cst_10 = arith.constant 0.000000e+00 : f32
      %26 = vector.broadcast %cst_10 : f32 to vector<16x128xf32>
      %27 = arith.select %24, %25, %26 : vector<16x128xi1>, vector<16x128xf32>
      %c0_11 = arith.constant 0 : index
      %c0_12 = arith.constant 0 : index
      %28 = vector.load %arg5[%c0_11, %c0_12] : memref<8x128xf32, #tpu.memory_space<vmem>>, vector<8x128xf32>
      %29 = vector.shape_cast %27 : vector<16x128xf32> to vector<2x8x128xf32>
      %cst_13 = arith.constant dense<0.000000e+00> : vector<8x128xf32>
      %30 = vector.multi_reduction <add>, %29, %cst_13 [0] : vector<2x8x128xf32> to vector<8x128xf32>
      %31 = arith.addf %28, %30 : vector<8x128xf32>
      %c0_14 = arith.constant 0 : index
      %c0_15 = arith.constant 0 : index
      %32 = vector.load %arg5[%c0_14, %c0_15] : memref<8x128xf32, #tpu.memory_space<vmem>>, vector<8x128xf32>
      tpu.vector_store %arg5[%c0_14, %c0_15], %31 {strides = array<i32>} : memref<8x128xf32, #tpu.memory_space<vmem>>, vector<8x128xf32>,
      %c0_16 = arith.constant 0 : index
      %c0_17 = arith.constant 0 : index
      %33 = vector.load %arg6[%c0_16, %c0_17] : memref<8x128xf32, #tpu.memory_space<vmem>>, vector<8x128xf32>
      %34 = arith.extui %24 : vector<16x128xi1> to vector<16x128xi32>
      %35 = arith.sitofp %34 : vector<16x128xi32> to vector<16x128xf32>
      %36 = vector.shape_cast %35 : vector<16x128xf32> to vector<2x8x128xf32>
      %cst_18 = arith.constant dense<0.000000e+00> : vector<8x128xf32>
      %37 = vector.multi_reduction <add>, %36, %cst_18 [0] : vector<2x8x128xf32> to vector<8x128xf32>
      %38 = arith.addf %33, %37 : vector<8x128xf32>
      %c0_19 = arith.constant 0 : index
      %c0_20 = arith.constant 0 : index
      %39 = vector.load %arg6[%c0_19, %c0_20] : memref<8x128xf32, #tpu.memory_space<vmem>>, vector<8x128xf32>
      tpu.vector_store %arg6[%c0_19, %c0_20], %38 {strides = array<i32>} : memref<8x128xf32, #tpu.memory_space<vmem>>, vector<8x128xf32>,
    } else {
    }
    %c0_i32_7 = arith.constant 0 : i32
    %14 = arith.cmpi eq, %arg1, %c0_i32_7 : i32
    %15 = arith.extui %14 : i1 to i32
    %c0_i32_8 = arith.constant 0 : i32
    %16 = arith.cmpi ne, %15, %c0_i32_8 : i32
    scf.if %16 {
      %c0_9 = arith.constant 0 : index
      %c0_10 = arith.constant 0 : index
      %17 = vector.load %arg5[%c0_9, %c0_10] : memref<8x128xf32, #tpu.memory_space<vmem>>, vector<8x128xf32>
      %18 = vector.shape_cast %17 : vector<8x128xf32> to vector<1x8x128xf32>
      %c0_11 = arith.constant 0 : index
      %c0_12 = arith.constant 0 : index
      %c0_13 = arith.constant 0 : index
      %19 = vector.load %arg3[%c0_11, %c0_12, %c0_13] : memref<1x8x128xf32, #tpu.memory_space<vmem>>, vector<1x8x128xf32>
      tpu.vector_store %arg3[%c0_11, %c0_12, %c0_13], %18 {strides = array<i32>} : memref<1x8x128xf32, #tpu.memory_space<vmem>>, vector<1x8x128xf32>,
      %c0_14 = arith.constant 0 : index
      %c0_15 = arith.constant 0 : index
      %20 = vector.load %arg6[%c0_14, %c0_15] : memref<8x128xf32, #tpu.memory_space<vmem>>, vector<8x128xf32>
      %21 = vector.shape_cast %20 : vector<8x128xf32> to vector<1x8x128xf32>
      %c0_16 = arith.constant 0 : index
      %c0_17 = arith.constant 0 : index
      %c0_18 = arith.constant 0 : index
      %22 = vector.load %arg4[%c0_16, %c0_17, %c0_18] : memref<1x8x128xf32, #tpu.memory_space<vmem>>, vector<1x8x128xf32>
      tpu.vector_store %arg4[%c0_16, %c0_17, %c0_18], %21 {strides = array<i32>} : memref<1x8x128xf32, #tpu.memory_space<vmem>>, vector<1x8x128xf32>,
    } else {
    }
    return
  }
  func.func @transform_0(%arg0: i32, %arg1: i32) -> (i32, i32) {
    %c1_i32 = arith.constant 1 : i32
    %0 = arith.muli %arg0, %c1_i32 : i32
    %1 = arith.addi %0, %arg1 : i32
    %c0_i32 = arith.constant 0 : i32
    %2 = arith.minsi %1, %c0_i32 : i32
    %c0_i32_0 = arith.constant 0 : i32
    %c0_i32_1 = arith.constant 0 : i32
    return %2, %c0_i32_0 : i32, i32
  }
  func.func @transform_1(%arg0: i32, %arg1: i32) -> (i32, i32, i32) {
    %c0_i32 = arith.constant 0 : i32
    %c0_i32_0 = arith.constant 0 : i32
    %c0_i32_1 = arith.constant 0 : i32
    return %arg0, %c0_i32, %c0_i32_0 : i32, i32, i32
  }
  func.func @transform_2(%arg0: i32, %arg1: i32) -> (i32, i32, i32) {
    %c0_i32 = arith.constant 0 : i32
    %c0_i32_0 = arith.constant 0 : i32
    %c0_i32_1 = arith.constant 0 : i32
    return %arg0, %c0_i32, %c0_i32_0 : i32, i32, i32
  }
}

</mosaic_0001>

<llo_original>
// kernel: tpu_custom_call.1
$region0: #{tpu_custom_call.1}
  #allocation0 [shape = 'u32[]', space=smem, size = 0x4, offset = 0x4, fixed_abs, tag = 'smem constant byte address 0x4 - core index']
  #allocation1 [shape = 'u32[144,128]{1,0:T(1,128)}', space=vmem, size = 0x12000, scoped, tag = 'internal scratch']
  #allocation2 [shape = 'f32[8,128]{1,0:T(8,128)}', space=vmem, size = 0x1000, scoped, tag = 'scratch operand']
  #allocation3 [shape = 'f32[8,128]{1,0:T(8,128)}', space=vmem, size = 0x1000, scoped, tag = 'scratch operand']
  %s0 = inlined_call_operand.hbm [shape: f32[16,128], index: 0, kind: input, shape index: {}]
  %s1 = inlined_call_operand.hbm [shape: f32[1,8,128], index: 1, kind: output, shape index: {0}]
  %s2 = inlined_call_operand.hbm [shape: f32[1,8,128], index: 2, kind: output, shape index: {1}]
  %3 = xla_tuple %s1, %s2
  %s4 = sld [smem:[#allocation0]]
  $region42: #{tpu_custom_call.1} parent=0
    _
  %s6 = ssub.s32 1, %s4
  %s7 = scalar_select 0, %s6, %s4
  $region1: #{tpu_custom_call.1} parent=0
    #allocation4 [shape = 'u8[8192]{0}', space=vmem, size = 0x2000, scoped, tag = 'input window, operand 0, single buffered']
    #allocation5 [shape = 's32[1]{0}', space=sflag, size = 0x4, scoped, tag = 'scoped memory for tpu_custom_call.1']
    #allocation6 [shape = 's32[1]{0}', space=sflag, size = 0x4, scoped, tag = 'scoped memory for tpu_custom_call.1']
    #allocation7 [shape = 'u8[4096]{0}', space=vmem, size = 0x1000, scoped, tag = 'output window, operand 0, single buffered']
    #allocation8 [shape = 'u8[4096]{0}', space=vmem, size = 0x1000, scoped, tag = 'output window, operand 1, single buffered']
    #allocation9 [shape = 's32[1]{0}', space=sflag, size = 0x4, scoped, tag = 'scoped memory for tpu_custom_call.1']
    %8 = vsyncpa [#allocation5], 0
    %9 = vsyncpa [#allocation6], 0
    %10 = vsyncpa [#allocation9], 0
    // Predicated region
    $region2: #{tpu_custom_call.1} parent=1 // pred_check
      _
    $region3: #{tpu_custom_call.1} parent=1 // pred_check_branch
      %12 = sbr.rel (0) target = $region5
    $region4: #{tpu_custom_call.1} parent=1 // pred_region
      %s13 = sadd.s32 0, 0
      %p14 = scmp.lt.s32.totalorder %s13, 0
      %s15 = scalar_select %p14, %s13, 0
      %s16 = smul.u32 2, %s15
      %s18 = ssub.s32 256, 256
      %19 = vsyncadd [#allocation5], %s18
      %s20 = smul.addr %s16, 128
      %s21 = scalar_lea.hbm %s0, %s20
      %s22 = sshll.u32 [#allocation4], 4
      %s23 = int_to_ptr.vmem [resolvable:$true] %s22
      %28 = dma.hbm_to_vmem [thread:$0]  %s21, 256, %s23, [#allocation5], 128, 128, 8
    $region5: #{tpu_custom_call.1} parent=1 // pred_fallthru
      _
    // Predicated region
    $region6: #{tpu_custom_call.1} parent=1 // pred_check
      _
    $region7: #{tpu_custom_call.1} parent=1 // pred_check_branch
      %30 = sbr.rel (0) target = $region9
    $region8: #{tpu_custom_call.1} parent=1 // pred_region
      %31 = dma.done [#allocation5], 256
    $region9: #{tpu_custom_call.1} parent=1 // pred_fallthru
      _
    %s32 = sadd.s32 0, 0
    %p33 = scmp.lt.s32.totalorder %s32, 0
    %s34 = scalar_select %p33, %s32, 0
    %s35 = smul.u32 2, %s34
    %p36 = scmp.eq.s32.totalorder 0, 0
    // Predicated region
    $region10: #{tpu_custom_call.1} parent=1 // pred_check
      %p37 = pneg %p36
    $region11: #{tpu_custom_call.1} parent=1 // pred_check_branch
      %39 = sbr.rel (%p37) target = $region13
    $region12: #{tpu_custom_call.1} parent=1 // pred_region
      %40 = vst [vmem:[#allocation2] sm:$0xff] 0.0
      %41 = vst [vmem:[#allocation3] sm:$0xff] 0.0
    $region13: #{tpu_custom_call.1} parent=1 // pred_fallthru
      _
    %s42 = sadd.s32 0, 0
    %s43 = smul.u32 %s42, 16
    %s44 = sadd.s32 %s43, 16
    %p45 = scmp.gt.s32.totalorder %s44, 16
    %v46 = vld [vmem:[#allocation4] sm:$0xff]
    %v47 = vld [vmem:[#allocation4 + $0x8] sm:$0xff]
    %p48 = scmp.le.s32.totalorder %s44, 16
    // Predicated region
    $region14: #{tpu_custom_call.1} parent=1 // pred_check
      %p49 = pneg %p48
    $region15: #{tpu_custom_call.1} parent=1 // pred_check_branch
      %51 = sbr.rel (%p49) target = $region17
    $region16: #{tpu_custom_call.1} parent=1 // pred_region
      %vm52 = vcmp.ne.f32.partialorder %v46, -1.0
      %vm53 = vcmp.ne.f32.partialorder %v47, -1.0
      %v54 = vmul.f32 %v46, %v46
      %v55 = vmul.f32 %v47, %v47
      %v56 = vsel %vm52, %v54, 0.0
      %v57 = vsel %vm53, %v55, 0.0
      %v58 = vld [vmem:[#allocation2] sm:$0xff]
      %v59 = vadd.f32 %v56, %v57
      %v60 = vadd.f32 %v58, %v59
      %61 = vst [vmem:[#allocation2] sm:$0xff] %v60
      %v62 = vld [vmem:[#allocation3] sm:$0xff]
      %v63 = vsel %vm52, 1, 0
      %v64 = vsel %vm53, 1, 0
      %v65 = vcvt.s32.f32 %v63
      %v66 = vcvt.s32.f32 %v64
      %v67 = vadd.f32 %v65, %v66
      %v68 = vadd.f32 %v62, %v67
      %69 = vst [vmem:[#allocation3] sm:$0xff] %v68
    $region17: #{tpu_custom_call.1} parent=1 // pred_fallthru
      _
    // Predicated region
    $region18: #{tpu_custom_call.1} parent=1 // pred_check
      %p70 = pneg %p45
    $region19: #{tpu_custom_call.1} parent=1 // pred_check_branch
      %72 = sbr.rel (%p70) target = $region21
    $region20: #{tpu_custom_call.1} parent=1 // pred_region
      %v73 = vlaneseq
      %v74 = vshrl.u32 %v73, 7
      %v75 = vadd.s32 %v74, 8
      %v76 = vstv %s43
      %v77 = vadd.s32 %v76, %v74
      %v78 = vadd.s32 %v76, %v75
      %vm79 = vcmp.lt.s32.totalorder %v77, 16
      %vm80 = vcmp.lt.s32.totalorder %v78, 16
      %vm81 = vcmp.ne.f32.partialorder %v46, -1.0
      %vm82 = vcmp.ne.f32.partialorder %v47, -1.0
      %vm83 = vmand %vm79, %vm81
      %vm84 = vmand %vm80, %vm82
      %v85 = vmul.f32 %v46, %v46
      %v86 = vmul.f32 %v47, %v47
      %v87 = vsel %vm83, %v85, 0.0
      %v88 = vsel %vm84, %v86, 0.0
      %v89 = vld [vmem:[#allocation2] sm:$0xff]
      %v90 = vadd.f32 %v87, %v88
      %v91 = vadd.f32 %v89, %v90
      %92 = vst [vmem:[#allocation2] sm:$0xff] %v91
      %v93 = vld [vmem:[#allocation3] sm:$0xff]
      %v94 = vsel %vm83, 1, 0
      %v95 = vsel %vm84, 1, 0
      %v96 = vcvt.s32.f32 %v94
      %v97 = vcvt.s32.f32 %v95
      %v98 = vadd.f32 %v96, %v97
      %v99 = vadd.f32 %v93, %v98
      %100 = vst [vmem:[#allocation3] sm:$0xff] %v99
    $region21: #{tpu_custom_call.1} parent=1 // pred_fallthru
      _
    // Predicated region
    $region22: #{tpu_custom_call.1} parent=1 // pred_check
      %p101 = pneg %p36
    $region23: #{tpu_custom_call.1} parent=1 // pred_check_branch
      %103 = sbr.rel (%p101) target = $region25
    $region24: #{tpu_custom_call.1} parent=1 // pred_region
      %v104 = vld [vmem:[#allocation2] sm:$0xff]
      %105 = vst [vmem:[#allocation7] sm:$0xff] %v104
      %v106 = vld [vmem:[#allocation3] sm:$0xff]
      %107 = vst [vmem:[#allocation8] sm:$0xff] %v106
    $region25: #{tpu_custom_call.1} parent=1 // pred_fallthru
      _
    // Predicated region
    $region26: #{tpu_custom_call.1} parent=1 // pred_check
      _
    $region27: #{tpu_custom_call.1} parent=1 // pred_check_branch
      %109 = sbr.rel (0) target = $region29
    $region28: #{tpu_custom_call.1} parent=1 // pred_region
      %s111 = ssub.s32 128, 128
      %112 = vsyncadd [#allocation6], %s111
      %s114 = sshll.u32 [#allocation7], 4
      %s115 = int_to_ptr.vmem [resolvable:$true] %s114
      %117 = dma.vmem_to_hbm [thread:$0]  %s115, 128, %s1, [#allocation6]
    $region29: #{tpu_custom_call.1} parent=1 // pred_fallthru
      _
    // Predicated region
    $region30: #{tpu_custom_call.1} parent=1 // pred_check
      _
    $region31: #{tpu_custom_call.1} parent=1 // pred_check_branch
      %119 = sbr.rel (0) target = $region33
    $region32: #{tpu_custom_call.1} parent=1 // pred_region
      %s121 = ssub.s32 128, 128
      %122 = vsyncadd [#allocation9], %s121
      %s124 = sshll.u32 [#allocation8], 4
      %s125 = int_to_ptr.vmem [resolvable:$true] %s124
      %127 = dma.vmem_to_hbm [thread:$0]  %s125, 128, %s2, [#allocation9]
    $region33: #{tpu_custom_call.1} parent=1 // pred_fallthru
      _
    // Predicated region
    $region34: #{tpu_custom_call.1} parent=1 // pred_check
      _
    $region35: #{tpu_custom_call.1} parent=1 // pred_check_branch
      %129 = sbr.rel (0) target = $region37
    $region36: #{tpu_custom_call.1} parent=1 // pred_region
      %130 = dma.done [#allocation6], 128
    $region37: #{tpu_custom_call.1} parent=1 // pred_fallthru
      _
    // Predicated region
    $region38: #{tpu_custom_call.1} parent=1 // pred_check
      _
    $region39: #{tpu_custom_call.1} parent=1 // pred_check_branch
      %132 = sbr.rel (0) target = $region41
    $region40: #{tpu_custom_call.1} parent=1 // pred_region
      %133 = dma.done [#allocation9], 128
    $region41: #{tpu_custom_call.1} parent=1 // pred_fallthru
      _
    %134 = vsyncpa [#allocation5], 1
    %135 = vsyncpa [#allocation6], 1
    %136 = vsyncpa [#allocation9], 1

</llo_original>
